<compile_context>
chip_gen: v6e
topology: v6e:2x2x1
jax: 0.10.0
libtpu: 0.0.40
codegen_flags: <defaults>
</compile_context>

<pallas_src>
import jax
import jax.numpy as jnp
from jax import lax
from jax.experimental import pallas as pl
from jax.experimental.pallas import tpu as pltpu

_EPS = 1e-6                 # torch.nn.PairwiseDistance default eps
_MIN_ROWS_TO_SPLIT = 1024   # below this a single grid step is fastest on all gens


def _round_up(x: int, m: int) -> int:
    return (x + m - 1) // m * m


def _cdiv(a: int, b: int) -> int:
    return (a + b - 1) // b


def _padded_row_bytes(S: int, D: int, vec_dtype, dis_dtype) -> int:
    """VMEM bytes one batch row occupies across the (block_b, S*D) vec block and
    the (block_b, S) dis block, including 128-lane minor-dim padding
    (sublane padding is avoided by keeping block_b a multiple of 8)."""
    vec_row = _round_up(S * D, 128) * jnp.dtype(vec_dtype).itemsize
    dis_row = _round_up(S, 128) * jnp.dtype(dis_dtype).itemsize
    return vec_row + dis_row


def _choose_tiling(B, S, D, vec_dtype, dis_dtype, block_b=None):
    """Pick (block_b, num_blocks, vmem_limit_bytes) with padding-aware math."""
    try:
        vmem_cap = int(pltpu.get_tpu_info().vmem_capacity_bytes)
    except Exception:
        vmem_cap = 64 << 20            # conservative fallback: v7x per-TC physical
    per_row = _padded_row_bytes(S, D, vec_dtype, dis_dtype)

    if block_b is None:
        # Double-buffered input blocks must fit a generation-aware budget; the
        # pipeline plateaus at a few MiB per buffer, so don't chase more.
        budget = min(vmem_cap // 4, 16 << 20)
        bt = int(budget // (2 * per_row))              # x2: double buffering
        bt = max(8, (bt // 8) * 8)                     # sublane-aligned tile
        if bt >= B:
            if B >= _MIN_ROWS_TO_SPLIT:
                # Large enough to amortize extra grid steps: keep >=2 blocks so
                # the "parallel" batch axis can feed both v7x TensorCores.
                bt = _round_up(_cdiv(B, 2), 8)
            else:
                bt = B                                 # single grid step
        block_b = bt
    else:
        assert 1 <= block_b <= B, "block_b must be in [1, B]"
        assert block_b == B or block_b % 8 == 0, (
            "block_b must equal B or be a multiple of 8 (sublane alignment)")

    num_blocks = _cdiv(B, block_b)
    est_bytes = 2 * block_b * per_row                  # double-buffered inputs
    vmem_limit = int(min(vmem_cap // 2, max(est_bytes + (4 << 20), 16 << 20)))
    return block_b, num_blocks, vmem_limit


def _make_kernel(*, batch: int, S: int, D: int, block_b: int, needs_mask: bool):
    def kernel(alpha_ref, vec_ref, dis_ref, w_ref, out_ref):
        """One batch tile -> one partial loss.

        alpha_ref: SMEM (1, 1) f32        runtime scalar (no recompiles per alpha)
        vec_ref  : VMEM (block_b, S*D)    native dtype, lane-dense rows
        dis_ref  : VMEM (block_b, S)      native dtype
        w_ref    : VMEM (1, S) f32        replicated across grid steps
        out_ref  : SMEM (1, 1) f32        this block's partial sum
        """
        alpha = alpha_ref[0, 0]
        vec = vec_ref[...].astype(jnp.float32)          # [bt, S*D] cast-on-load
        dis = dis_ref[...].astype(jnp.float32)          # [bt, S]
        w = w_ref[...]                                  # [1, S]

        # anchor_trajs = traj_list[0].repeat(sample_num, 1): sample 0 occupies
        # the first D lanes of every flattened row.
        anchor = vec[:, :D]                             # [bt, D]

        # torch.pairwise_distance(x1, x2, p=2) == ||x1 - x2 + eps||_2
        cols = []
        for s in range(S):                              # static loop, S is tiny
            diff = anchor - vec[:, s * D:(s + 1) * D] + _EPS      # [bt, D]
            cols.append(jnp.sum(diff * diff, axis=-1, keepdims=True))
        dis_pred = jnp.sqrt(jnp.concatenate(cols, axis=-1))       # [bt, S]

        sim_pred = jnp.exp(-dis_pred)                   # [bt, S]  (EUP)
        sim_truth = jnp.exp(-alpha * dis)               # [bt, S]  (EUP)
        div = sim_truth - sim_pred
        contrib = div * div * w                         # [bt, S]

        if needs_mask:                                  # ragged tail of the batch
            row = (pl.program_id(0) * block_b
                   + lax.broadcasted_iota(jnp.int32, (block_b, 1), 0))
            contrib = jnp.where(row < batch, contrib, 0.0)

        out_ref[0, 0] = jnp.sum(contrib)

    return kernel


def ranking_loss(vec: jax.Array, all_dis: jax.Array, weight: jax.Array,
                 alpha, *, block_b: int | None = None) -> jax.Array:
    """vec: [B, S, D], all_dis: [B, S], weight: [S], alpha: scalar -> f32 scalar."""
    B, S, D = vec.shape
    assert all_dis.shape == (B, S)
    assert weight.shape == (S,)

    block_b, num_blocks, vmem_limit = _choose_tiling(
        B, S, D, vec.dtype, all_dis.dtype, block_b)
    needs_mask = (num_blocks * block_b) != B

    # Lane-dense view of vec: collapsing the two minor dims is a free row-major
    # reshape (no HBM traffic). Inputs keep their native dtype (bf16 passthrough).
    vec_flat = vec.reshape(B, S * D)
    w2 = weight.astype(jnp.float32).reshape(1, S)
    alpha_arr = jnp.asarray(alpha, dtype=jnp.float32).reshape(1, 1)

    kernel = _make_kernel(batch=B, S=S, D=D, block_b=block_b,
                          needs_mask=needs_mask)

    partials = pl.pallas_call(
        kernel,
        out_shape=jax.ShapeDtypeStruct((num_blocks, 1), jnp.float32),
        grid=(num_blocks,),
        in_specs=[
            # alpha: whole (1,1) scalar in SMEM (runtime operand, no recompiles).
            pl.BlockSpec(memory_space=pltpu.MemorySpace.SMEM),
            # vec tile: (block_b, S*D); last dim is the full dim -> dense rows.
            pl.BlockSpec((block_b, S * D), lambda b: (b, 0)),
            # all_dis tile: (block_b, S); last dim is the full dim.
            pl.BlockSpec((block_b, S), lambda b: (b, 0)),
            # weight: same (1, S) block every grid step (hoisted broadcast).
            pl.BlockSpec((1, S), lambda b: (0, 0)),
        ],
        # Independent per-block partial sums -> the batch axis stays "parallel"
        # (v7x megacore) instead of a serialized accumulator.
        out_specs=pl.BlockSpec((1, 1), lambda b: (b, 0),
                               memory_space=pltpu.MemorySpace.SMEM),
        compiler_params=pltpu.CompilerParams(
            dimension_semantics=("parallel",),
            vmem_limit_bytes=vmem_limit),
    )(alpha_arr, vec_flat, all_dis, w2)

    # Final f32 reduction over the (tiny) per-block partials outside the kernel.
    return jnp.sum(partials)


def make_weight(sample_num: int) -> jnp.ndarray:
    """Deterministic weight vector exactly as RankingLoss.__init__ builds it."""
    single_sample = sample_num // 2
    w = [1]
    for index in range(single_sample, 1, -1):
        w.append(index)
    for index in range(1, single_sample + 1, 1):
        w.append(index)
    w = jnp.asarray(w, dtype=jnp.float32)
    return w / jnp.sum(w)


def _reference(vec, all_dis, weight, alpha):
    anchor = vec[:, 0:1, :]
    dis_pred = jnp.sqrt(jnp.sum((anchor - vec + _EPS) ** 2, axis=-1))
    return jnp.sum(
        (jnp.exp(-alpha * all_dis) - jnp.exp(-dis_pred)) ** 2 * weight[None, :]
    )


if __name__ == "__main__":
    key = jax.random.PRNGKey(0)
    S, D = 8, 32               # sample_num, d_model
    weight = make_weight(S)

    def run_case(B, dtype, block_b=None, alpha=0.5, tol=1e-4):
        k1, k2 = jax.random.split(jax.random.fold_in(key, B))
        vec = jax.random.normal(k1, (B, S, D), dtype=jnp.float32).astype(dtype)
        all_dis = jnp.abs(jax.random.normal(k2, (B, S), dtype=jnp.float32)).astype(dtype)
        loss = jax.block_until_ready(
            ranking_loss(vec, all_dis, weight, alpha, block_b=block_b))
        ref = _reference(vec.astype(jnp.float32), all_dis.astype(jnp.float32),
                         weight, alpha)
        assert jnp.allclose(loss, ref, rtol=tol, atol=tol), (
            B, dtype, block_b, loss, ref)

    # 1) Tiny default path (the model's real regime): one grid step, block_b=B.
    run_case(2, jnp.float32, alpha=0.5)
    run_case(2, jnp.float32, alpha=1.5)   # same compiled kernel, alpha is a runtime scalar
    # 2) Gridded path, exact division (block_b=8 -> grid=(3,)).
    run_case(24, jnp.float32, block_b=8)
    # 3) Gridded path with a ragged tail (20 rows, 8-row tiles -> in-kernel mask).
    run_case(20, jnp.float32, block_b=8)
    # 4) bf16 inputs stream through at native width and are cast to f32 in-kernel.
    run_case(16, jnp.bfloat16)

    print("KERNEL_OK")
</pallas_src>

<mosaic_0001>
module attributes {stable_mosaic.version = 11 : i64} {
  func.func @kernel(%arg0: i32, %arg1: memref<1x1xf32, #tpu.memory_space<smem>>, %arg2: memref<2x256xf32, #tpu.memory_space<vmem>>, %arg3: memref<2x8xf32, #tpu.memory_space<vmem>>, %arg4: memref<1x8xf32, #tpu.memory_space<vmem>>, %arg5: memref<1x1xf32, #tpu.memory_space<smem>>) attributes {dimension_semantics = [#tpu.dimension_semantics<parallel>], iteration_bounds = array<i64: 1>, scalar_prefetch = 0 : i64, scratch_operands = 0 : i64, tpu.core_type = #tpu.core_type<tc>, window_params = [{transform_indices = @transform_0, window_bounds = array<i64: 1, 1>}, {transform_indices = @transform_1, window_bounds = array<i64: 2, 256>}, {transform_indices = @transform_2, window_bounds = array<i64: 2, 8>}, {pipeline_mode = #tpu.pipeline_mode<synchronous>, transform_indices = @transform_3, window_bounds = array<i64: 1, 8>}, {transform_indices = @transform_4, window_bounds = array<i64: 1, 1>}]} {
    %c0 = arith.constant 0 : index
    %c0_0 = arith.constant 0 : index
    %0 = memref.load %arg1[%c0, %c0_0] : memref<1x1xf32, #tpu.memory_space<smem>>
    %c0_1 = arith.constant 0 : index
    %c0_2 = arith.constant 0 : index
    %1 = vector.load %arg2[%c0_1, %c0_2] : memref<2x256xf32, #tpu.memory_space<vmem>>, vector<2x256xf32>
    %c0_3 = arith.constant 0 : index
    %c0_4 = arith.constant 0 : index
    %2 = vector.load %arg3[%c0_3, %c0_4] : memref<2x8xf32, #tpu.memory_space<vmem>>, vector<2x8xf32>
    %c0_5 = arith.constant 0 : index
    %c0_6 = arith.constant 0 : index
    %3 = vector.load %arg4[%c0_5, %c0_6] : memref<1x8xf32, #tpu.memory_space<vmem>>, vector<1x8xf32>
    %4 = vector.extract_strided_slice %1 {offsets = [0, 0], sizes = [2, 32], strides = [1, 1]} : vector<2x256xf32> to vector<2x32xf32>
    %5 = vector.extract_strided_slice %1 {offsets = [0, 0], sizes = [2, 32], strides = [1, 1]} : vector<2x256xf32> to vector<2x32xf32>
    %6 = arith.subf %4, %5 : vector<2x32xf32>
    %cst = arith.constant 9.99999997E-7 : f32
    %7 = vector.broadcast %cst : f32 to vector<2x32xf32>
    %8 = arith.addf %6, %7 : vector<2x32xf32>
    %9 = arith.mulf %8, %8 : vector<2x32xf32>
    %cst_7 = arith.constant dense<0.000000e+00> : vector<2xf32>
    %10 = vector.multi_reduction <add>, %9, %cst_7 [1] : vector<2x32xf32> to vector<2xf32>
    %11 = vector.shape_cast %10 : vector<2xf32> to vector<2x1xf32>
    %12 = vector.extract_strided_slice %1 {offsets = [0, 32], sizes = [2, 32], strides = [1, 1]} : vector<2x256xf32> to vector<2x32xf32>
    %13 = arith.subf %4, %12 : vector<2x32xf32>
    %cst_8 = arith.constant 9.99999997E-7 : f32
    %14 = vector.broadcast %cst_8 : f32 to vector<2x32xf32>
    %15 = arith.addf %13, %14 : vector<2x32xf32>
    %16 = arith.mulf %15, %15 : vector<2x32xf32>
    %cst_9 = arith.constant dense<0.000000e+00> : vector<2xf32>
    %17 = vector.multi_reduction <add>, %16, %cst_9 [1] : vector<2x32xf32> to vector<2xf32>
    %18 = vector.shape_cast %17 : vector<2xf32> to vector<2x1xf32>
    %19 = vector.extract_strided_slice %1 {offsets = [0, 64], sizes = [2, 32], strides = [1, 1]} : vector<2x256xf32> to vector<2x32xf32>
    %20 = arith.subf %4, %19 : vector<2x32xf32>
    %cst_10 = arith.constant 9.99999997E-7 : f32
    %21 = vector.broadcast %cst_10 : f32 to vector<2x32xf32>
    %22 = arith.addf %20, %21 : vector<2x32xf32>
    %23 = arith.mulf %22, %22 : vector<2x32xf32>
    %cst_11 = arith.constant dense<0.000000e+00> : vector<2xf32>
    %24 = vector.multi_reduction <add>, %23, %cst_11 [1] : vector<2x32xf32> to vector<2xf32>
    %25 = vector.shape_cast %24 : vector<2xf32> to vector<2x1xf32>
    %26 = vector.extract_strided_slice %1 {offsets = [0, 96], sizes = [2, 32], strides = [1, 1]} : vector<2x256xf32> to vector<2x32xf32>
    %27 = arith.subf %4, %26 : vector<2x32xf32>
    %cst_12 = arith.constant 9.99999997E-7 : f32
    %28 = vector.broadcast %cst_12 : f32 to vector<2x32xf32>
    %29 = arith.addf %27, %28 : vector<2x32xf32>
    %30 = arith.mulf %29, %29 : vector<2x32xf32>
    %cst_13 = arith.constant dense<0.000000e+00> : vector<2xf32>
    %31 = vector.multi_reduction <add>, %30, %cst_13 [1] : vector<2x32xf32> to vector<2xf32>
    %32 = vector.shape_cast %31 : vector<2xf32> to vector<2x1xf32>
    %33 = vector.extract_strided_slice %1 {offsets = [0, 128], sizes = [2, 32], strides = [1, 1]} : vector<2x256xf32> to vector<2x32xf32>
    %34 = arith.subf %4, %33 : vector<2x32xf32>
    %cst_14 = arith.constant 9.99999997E-7 : f32
    %35 = vector.broadcast %cst_14 : f32 to vector<2x32xf32>
    %36 = arith.addf %34, %35 : vector<2x32xf32>
    %37 = arith.mulf %36, %36 : vector<2x32xf32>
    %cst_15 = arith.constant dense<0.000000e+00> : vector<2xf32>
    %38 = vector.multi_reduction <add>, %37, %cst_15 [1] : vector<2x32xf32> to vector<2xf32>
    %39 = vector.shape_cast %38 : vector<2xf32> to vector<2x1xf32>
    %40 = vector.extract_strided_slice %1 {offsets = [0, 160], sizes = [2, 32], strides = [1, 1]} : vector<2x256xf32> to vector<2x32xf32>
    %41 = arith.subf %4, %40 : vector<2x32xf32>
    %cst_16 = arith.constant 9.99999997E-7 : f32
    %42 = vector.broadcast %cst_16 : f32 to vector<2x32xf32>
    %43 = arith.addf %41, %42 : vector<2x32xf32>
    %44 = arith.mulf %43, %43 : vector<2x32xf32>
    %cst_17 = arith.constant dense<0.000000e+00> : vector<2xf32>
    %45 = vector.multi_reduction <add>, %44, %cst_17 [1] : vector<2x32xf32> to vector<2xf32>
    %46 = vector.shape_cast %45 : vector<2xf32> to vector<2x1xf32>
    %47 = vector.extract_strided_slice %1 {offsets = [0, 192], sizes = [2, 32], strides = [1, 1]} : vector<2x256xf32> to vector<2x32xf32>
    %48 = arith.subf %4, %47 : vector<2x32xf32>
    %cst_18 = arith.constant 9.99999997E-7 : f32
    %49 = vector.broadcast %cst_18 : f32 to vector<2x32xf32>
    %50 = arith.addf %48, %49 : vector<2x32xf32>
    %51 = arith.mulf %50, %50 : vector<2x32xf32>
    %cst_19 = arith.constant dense<0.000000e+00> : vector<2xf32>
    %52 = vector.multi_reduction <add>, %51, %cst_19 [1] : vector<2x32xf32> to vector<2xf32>
    %53 = vector.shape_cast %52 : vector<2xf32> to vector<2x1xf32>
    %54 = vector.extract_strided_slice %1 {offsets = [0, 224], sizes = [2, 32], strides = [1, 1]} : vector<2x256xf32> to vector<2x32xf32>
    %55 = arith.subf %4, %54 : vector<2x32xf32>
    %cst_20 = arith.constant 9.99999997E-7 : f32
    %56 = vector.broadcast %cst_20 : f32 to vector<2x32xf32>
    %57 = arith.addf %55, %56 : vector<2x32xf32>
    %58 = arith.mulf %57, %57 : vector<2x32xf32>
    %cst_21 = arith.constant dense<0.000000e+00> : vector<2xf32>
    %59 = vector.multi_reduction <add>, %58, %cst_21 [1] : vector<2x32xf32> to vector<2xf32>
    %60 = vector.shape_cast %59 : vector<2xf32> to vector<2x1xf32>
    %61 = tpu.concatenate %11, %18, %25, %32, %39, %46, %53, %60 in 1 : vector<2x1xf32>, vector<2x1xf32>, vector<2x1xf32>, vector<2x1xf32>, vector<2x1xf32>, vector<2x1xf32>, vector<2x1xf32>, vector<2x1xf32> -> vector<2x8xf32>
    %62 = math.sqrt %61 : vector<2x8xf32>
    %cst_22 = arith.constant 0.000000e+00 : f32
    %63 = vector.broadcast %cst_22 : f32 to vector<2x8xf32>
    %64 = arith.subf %63, %62 : vector<2x8xf32>
    %65 = math.exp %64 : vector<2x8xf32>
    %cst_23 = arith.constant 0.000000e+00 : f32
    %66 = arith.subf %cst_23, %0 : f32
    %67 = vector.broadcast %66 : f32 to vector<2x8xf32>
    %68 = arith.mulf %67, %2 : vector<2x8xf32>
    %69 = math.exp %68 : vector<2x8xf32>
    %70 = arith.subf %69, %65 : vector<2x8xf32>
    %71 = arith.mulf %70, %70 : vector<2x8xf32>
    %72 = vector.broadcast %3 : vector<1x8xf32> to vector<2x8xf32>
    %73 = arith.mulf %71, %72 : vector<2x8xf32>
    %74 = vector.shape_cast %73 : vector<2x8xf32> to vector<1x2x8xf32>
    %cst_24 = arith.constant dense<0.000000e+00> : vector<1xf32>
    %75 = vector.multi_reduction <add>, %74, %cst_24 [1, 2] : vector<1x2x8xf32> to vector<1xf32>
    %76 = vector.shape_cast %75 : vector<1xf32> to vector<1x1x1xf32>
    %77 = vector.extract %76[0, 0, 0] : f32 from vector<1x1x1xf32>
    %c0_25 = arith.constant 0 : index
    %c0_26 = arith.constant 0 : index
    %78 = memref.load %arg5[%c0_25, %c0_26] : memref<1x1xf32, #tpu.memory_space<smem>>
    memref.store %77, %arg5[%c0_25, %c0_26] : memref<1x1xf32, #tpu.memory_space<smem>>
    return
  }
  func.func @transform_0(%arg0: i32) -> (i32, i32) {
    %c0_i32 = arith.constant 0 : i32
    %c0_i32_0 = arith.constant 0 : i32
    %c0_i32_1 = arith.constant 0 : i32
    return %c0_i32, %c0_i32_0 : i32, i32
  }
  func.func @transform_1(%arg0: i32) -> (i32, i32) {
    %c0_i32 = arith.constant 0 : i32
    %c0_i32_0 = arith.constant 0 : i32
    return %arg0, %c0_i32 : i32, i32
  }
  func.func @transform_2(%arg0: i32) -> (i32, i32) {
    %c0_i32 = arith.constant 0 : i32
    %c0_i32_0 = arith.constant 0 : i32
    return %arg0, %c0_i32 : i32, i32
  }
  func.func @transform_3(%arg0: i32) -> (i32, i32) {
    %c0_i32 = arith.constant 0 : i32
    %c0_i32_0 = arith.constant 0 : i32
    %c0_i32_1 = arith.constant 0 : i32
    return %c0_i32, %c0_i32_0 : i32, i32
  }
  func.func @transform_4(%arg0: i32) -> (i32, i32) {
    %c0_i32 = arith.constant 0 : i32
    %c0_i32_0 = arith.constant 0 : i32
    return %arg0, %c0_i32 : i32, i32
  }
}

</mosaic_0001>

<llo_original>
// kernel: tpu_custom_call.1
$region0: #{tpu_custom_call.1}
  #allocation0 [shape = 'u32[]', space=smem, size = 0x4, offset = 0x4, fixed_abs, tag = 'smem constant byte address 0x4 - core index']
  #allocation1 [shape = 'u32[144,128]{1,0:T(1,128)}', space=vmem, size = 0x12000, scoped, tag = 'internal scratch']
  #allocation2 [shape = 'f32[1,1]{1,0:T(1,128)S(6)}', space=smem, size = 0x200, scoped, tag = 'scoped memory for tpu_custom_call.1']
  %s0 = inlined_call_operand.<no memory space> [shape: f32[1,1], index: 0, kind: input, shape index: {}]
  %s1 = inlined_call_operand.hbm [shape: f32[2,256], index: 1, kind: input, shape index: {}]
  %s2 = inlined_call_operand.vmem [shape: f32[2,8], index: 2, kind: input, shape index: {}]
  %s3 = inlined_call_operand.vmem [shape: f32[1,8], index: 3, kind: input, shape index: {}]
  %s4 = inlined_call_operand.hbm [shape: f32[1,1], index: 4, kind: output, shape index: {}]
  %s5 = sld [smem:[#allocation0]]
  $region30: #{tpu_custom_call.1} parent=0
    _
  %s7 = ssub.s32 1, %s5
  %s8 = scalar_select 0, %s7, %s5
  %9 = sst [smem:[#allocation2]] %s0
  $region1: #{tpu_custom_call.1} parent=0
    #allocation3 [shape = 'u8[2048]{0}', space=vmem, size = 0x800, scoped, tag = 'input window, operand 1, single buffered']
    #allocation4 [shape = 's32[1]{0}', space=sflag, size = 0x4, scoped, tag = 'scoped memory for tpu_custom_call.1']
    #allocation5 [shape = 's32[1]{0}', space=sflag, size = 0x4, scoped, tag = 'scoped memory for tpu_custom_call.1']
    #allocation6 [shape = 'u8[512]{0}', space=smem, size = 0x200, scoped, tag = 'output window, operand 0, single buffered']
    %10 = vsyncpa [#allocation4], 0
    %11 = vsyncpa [#allocation5], 0
    // Predicated region
    $region2: #{tpu_custom_call.1} parent=1 // pred_check
      _
    $region3: #{tpu_custom_call.1} parent=1 // pred_check_branch
      %13 = sbr.rel (0) target = $region5
    $region4: #{tpu_custom_call.1} parent=1 // pred_region
      _
    $region5: #{tpu_custom_call.1} parent=1 // pred_fallthru
      _
    // Predicated region
    $region6: #{tpu_custom_call.1} parent=1 // pred_check
      _
    $region7: #{tpu_custom_call.1} parent=1 // pred_check_branch
      %15 = sbr.rel (0) target = $region9
    $region8: #{tpu_custom_call.1} parent=1 // pred_region
      %s17 = ssub.s32 64, 64
      %18 = vsyncadd [#allocation4], %s17
      %s20 = sshll.u32 [#allocation3], 4
      %s21 = int_to_ptr.vmem [resolvable:$true] %s20
      %23 = dma.hbm_to_vmem [thread:$0]  %s1, 64, %s21, [#allocation4]
    $region9: #{tpu_custom_call.1} parent=1 // pred_fallthru
      _
    // Predicated region
    $region10: #{tpu_custom_call.1} parent=1 // pred_check
      _
    $region11: #{tpu_custom_call.1} parent=1 // pred_check_branch
      %25 = sbr.rel (0) target = $region13
    $region12: #{tpu_custom_call.1} parent=1 // pred_region
      _
    $region13: #{tpu_custom_call.1} parent=1 // pred_fallthru
      _
    // Predicated region
    $region14: #{tpu_custom_call.1} parent=1 // pred_check
      _
    $region15: #{tpu_custom_call.1} parent=1 // pred_check_branch
      %27 = sbr.rel (0) target = $region17
    $region16: #{tpu_custom_call.1} parent=1 // pred_region
      _
    $region17: #{tpu_custom_call.1} parent=1 // pred_fallthru
      _
    // Predicated region
    $region18: #{tpu_custom_call.1} parent=1 // pred_check
      _
    $region19: #{tpu_custom_call.1} parent=1 // pred_check_branch
      %29 = sbr.rel (0) target = $region21
    $region20: #{tpu_custom_call.1} parent=1 // pred_region
      %30 = dma.done [#allocation4], 64
    $region21: #{tpu_custom_call.1} parent=1 // pred_fallthru
      _
    %s31 = sld [smem:[#allocation2]]
    %v32 = vld [vmem:[#allocation3] sm:$0xf]
    %v33 = vld [vmem:[%s2] sm:$0x3]
    %v34 = vld [vmem:[%s3] sm:$0x1]
    %v35 = vsub.f32 %v32, %v32
    %v36 = vadd.f32 %v35, 1e-06
    %v37 = vmul.f32 %v36, %v36
    %vm38 = vcmask 254976
    %v39 = vsel %vm38, %v37, 0.0
    %40 = vadd.xlane.f32.xlu0 %v39
    %v41 = vpop.xlane.xlu0 %40
    %43 = vrot.lane.b32.xlu0 %v32, 96
    %v44 = vpop.permute.xlu0 %43
    %v46 = vsub.f32 %v32, %v44
    %v47 = vadd.f32 %v46, 1e-06
    %v48 = vmul.f32 %v47, %v47
    %v49 = vsel %vm38, %v48, 0.0
    %50 = vadd.xlane.f32.xlu0 %v49
    %v51 = vpop.xlane.xlu0 %50
    %52 = vrot.lane.b32.xlu0 %v32, 64
    %v53 = vpop.permute.xlu0 %52
    %v55 = vsub.f32 %v32, %v53
    %v56 = vadd.f32 %v55, 1e-06
    %v57 = vmul.f32 %v56, %v56
    %v58 = vsel %vm38, %v57, 0.0
    %59 = vadd.xlane.f32.xlu0 %v58
    %v60 = vpop.xlane.xlu0 %59
    %61 = vrot.lane.b32.xlu0 %v32, 32
    %v62 = vpop.permute.xlu0 %61
    %v64 = vsub.f32 %v32, %v62
    %v65 = vadd.f32 %v64, 1e-06
    %v66 = vmul.f32 %v65, %v65
    %v67 = vsel %vm38, %v66, 0.0
    %68 = vadd.xlane.f32.xlu0 %v67
    %v69 = vpop.xlane.xlu0 %68
    %v70 = vrot.slane %v32, 2
    %v72 = vsub.f32 %v32, %v70
    %v73 = vadd.f32 %v72, 1e-06
    %v74 = vmul.f32 %v73, %v73
    %v75 = vsel %vm38, %v74, 0.0
    %76 = vadd.xlane.f32.xlu0 %v75
    %v77 = vpop.xlane.xlu0 %76
    %v78 = vrot.slane %v44, 2
    %v80 = vsub.f32 %v32, %v78
    %v81 = vadd.f32 %v80, 1e-06
    %v82 = vmul.f32 %v81, %v81
    %v83 = vsel %vm38, %v82, 0.0
    %84 = vadd.xlane.f32.xlu0 %v83
    %v85 = vpop.xlane.xlu0 %84
    %v86 = vrot.slane %v53, 2
    %v88 = vsub.f32 %v32, %v86
    %v89 = vadd.f32 %v88, 1e-06
    %v90 = vmul.f32 %v89, %v89
    %v91 = vsel %vm38, %v90, 0.0
    %92 = vadd.xlane.f32.xlu0 %v91
    %v93 = vpop.xlane.xlu0 %92
    %v94 = vrot.slane %v62, 2
    %v96 = vsub.f32 %v32, %v94
    %v97 = vadd.f32 %v96, 1e-06
    %v98 = vmul.f32 %v97, %v97
    %v99 = vsel %vm38, %v98, 0.0
    %100 = vadd.xlane.f32.xlu0 %v99
    %v101 = vpop.xlane.xlu0 %100
    %vm102 = vcmask 7168
    %v103 = vsel %vm102, %v41, %v51
    %vm104 = vcmask 15360
    %v105 = vsel %vm104, %v103, %v60
    %vm106 = vcmask 23552
    %v107 = vsel %vm106, %v105, %v69
    %vm108 = vcmask 31744
    %v109 = vsel %vm108, %v107, %v77
    %vm110 = vcmask 39936
    %v111 = vsel %vm110, %v109, %v85
    %vm112 = vcmask 48128
    %v113 = vsel %vm112, %v111, %v93
    %vm114 = vcmask 56320
    %v115 = vsel %vm114, %v113, %v101
    %v116 = vrsqrt.pop %v115
    %v117 = vmul.f32 %v115, %v116
    %vm118 = vcmp.eq.f32.partialorder %v115, inf
    %v119 = vsel %vm118, %v115, %v117
    %vm120 = vcmp.eq.f32.partialorder %v115, 0.0
    %v121 = vand.u32 %v115, 2147483648
    %v122 = vsel %vm120, %v121, %v119
    %v123 = vsub.f32 0.0, %v122
    %v124 = vmul.f32 %v123, 1.442695
    %v125 = vpow.pop %v124
    %s126 = ssub.f32 0.0, %s31
    %v127 = vstv %s126
    %v128 = vmul.f32 %v127, %v33
    %v129 = vmul.f32 %v128, 1.442695
    %v130 = vpow.pop %v129
    %v131 = vsub.f32 %v130, %v125
    %v132 = vmul.f32 %v131, %v131
    %v134 = vlaneseq
    %v135 = vshrl.u32 %v134, 7
    %v136 = vsub.s32 0, %v135
    %v137 = vrot.slane %v34, %v136
    %v139 = vmul.f32 %v132, %v137
    %vm140 = vcmask 58368
    %v141 = vsel %vm140, %v139, 0.0
    %142 = vadd.xlane.f32.xlu0 %v141
    %v143 = vpop.xlane.xlu0 %142
    %v144 = vrot.slane %v143, 4
    %v145 = vadd.f32 %v143, %v144
    %v146 = vrot.slane %v145, 2
    %v147 = vadd.f32 %v145, %v146
    %v148 = vrot.slane %v147, 1
    %v149 = vadd.f32 %v147, %v148
    %s150 = vtos %v149
    %s151 = scalar_lea.smem [#allocation6], 0
    %152 = sst [smem:[%s151]] %s150
    // Predicated region
    $region22: #{tpu_custom_call.1} parent=1 // pred_check
      _
    $region23: #{tpu_custom_call.1} parent=1 // pred_check_branch
      %154 = sbr.rel (0) target = $region25
    $region24: #{tpu_custom_call.1} parent=1 // pred_region
      %s156 = ssub.s32 16, 16
      %157 = vsyncadd [#allocation5], %s156
      %160 = dma.smem_to_hbm [#allocation6], 16, %s4, [#allocation5]
    $region25: #{tpu_custom_call.1} parent=1 // pred_fallthru
      _
    // Predicated region
    $region26: #{tpu_custom_call.1} parent=1 // pred_check
      _
    $region27: #{tpu_custom_call.1} parent=1 // pred_check_branch
      %162 = sbr.rel (0) target = $region29
    $region28: #{tpu_custom_call.1} parent=1 // pred_region
      %163 = dma.done [#allocation5], 16
    $region29: #{tpu_custom_call.1} parent=1 // pred_fallthru
      _
    %164 = sfence
    %165 = vsyncpa [#allocation4], 1
    %166 = vsyncpa [#allocation5], 1

</llo_original>
